<compile_context>
chip_gen: v5e
topology: v5e:2x2
jax: 0.10.0
libtpu: 0.0.40
codegen_flags: <defaults>
</compile_context>

<pallas_src>
import math

import numpy as np
import jax
import jax.numpy as jnp
from jax.experimental import pallas as pl
from jax.experimental.pallas import tpu as pltpu


POOL_KS = (2, 3, 5, 6)          # MaxPool1d kernel/stride sizes of SPPblock
MAX_K = max(POOL_KS)
N_POOL = len(POOL_KS)


# ----------------------------------------------------------------------------
# Interpolation / selection matrices (host-side, exact PyTorch semantics)
# ----------------------------------------------------------------------------

def _interp_matrix(s, t):
    """U (s, t): linear, align_corners=True interpolation from length s to t."""
    M = np.zeros((s, t), dtype=np.float32)
    if t == 1:
        M[0, 0] = 1.0
        return M
    pos = np.arange(t, dtype=np.float64) * max(s - 1, 0) / (t - 1)
    i0 = np.clip(np.floor(pos).astype(np.int64), 0, s - 1)
    i1 = np.minimum(i0 + 1, s - 1)
    w1 = (pos - i0).astype(np.float32)
    w0 = (1.0 - w1).astype(np.float32)
    cols = np.arange(t)
    M[i0, cols] += w0
    M[i1, cols] += w1
    return M


def _select_interp_matrices(T, dtype=jnp.bfloat16):
    """A_k (T, T): row s*k carries the interp weights of pooled sample s.

    (v @ A_k)[t] == sum_s conv(pool_k(x))[s] * U_k[s, t] when lane s*k of v
    holds the conv output of pooling window s; every other lane of v hits an
    all-zero row of A_k and is ignored (this is what makes the circularly
    wrapped / garbage tail lanes of the rolled sliding max harmless).

    Stored in bf16 by default: A only feeds the MXU, accumulation is f32.
    """
    mats = []
    for k in POOL_KS:
        To = T // k
        U = _interp_matrix(To, T)                   # (To, T)
        A = np.zeros((T, T), dtype=np.float32)
        A[np.arange(To) * k, :] = U
        mats.append(A)
    return jnp.asarray(np.stack(mats), dtype=dtype)  # (N_POOL, T, T)


# ----------------------------------------------------------------------------
# Fused SPP kernel (Bt batch elements per grid step)
# ----------------------------------------------------------------------------

def _spp_kernel(x_ref, w2_ref, b_ref, a_ref, o_ref):
    """Fused maxpool(2,3,5,6) + conv1x1 + linear-upsample + channel concat.

    x_ref:  (Bt, C, T)        input batch tile (f32)
    w2_ref: (Bt, Bt*C)        block-diagonal 1x1-conv weight, W2[b, b*C+c]=w[c]
    b_ref:  (1,) in SMEM      conv bias scalar
    a_ref:  (N_POOL, T, T)    fused column-select + linear-interp matrices
    o_ref:  (Bt, N_POOL+C, T) channels 0..3 = layer1..4, channels 4.. = x
    """
    bt, C, T = x_ref.shape
    x3 = x_ref[...]                         # (Bt, C, T)
    x2 = x3.reshape(bt * C, T)              # row r = b*C + c  (free: C % 8 == 0)
    w2 = w2_ref[...]                        # (Bt, Bt*C)
    bias = b_ref[0]                         # scalar from SMEM

    # Running sliding-window max: VPU maxima over XLU-rolled copies of x.
    # roll(x, T - i) == jnp.roll(x, -i): lane t holds x[t + i] (wrapped lanes
    # are never selected by A_k - see _select_interp_matrices docstring).
    wm = x2
    width = 1
    wms = []
    for k in POOL_KS:
        for i in range(width, k):
            wm = jnp.maximum(wm, pltpu.roll(x2, shift=T - i, axis=1))
        width = k
        wms.append(wm)                      # window-max of width k, (Bt*C, T)

    # All four 1x1 convs in a single MXU call when the lane concat stays
    # 128-aligned; otherwise fall back to four M=Bt matmuls.
    if T % 128 == 0:
        wm_all = jnp.concatenate(wms, axis=1)                       # (Bt*C, 4T)
        v_all = jnp.dot(w2, wm_all, preferred_element_type=jnp.float32)
        vs = [v_all[:, idx * T:(idx + 1) * T] for idx in range(N_POOL)]
    else:
        vs = [jnp.dot(w2, wm_k, preferred_element_type=jnp.float32)
              for wm_k in wms]

    # Per scale: select every k-th lane + linear upsample back to T in one
    # (Bt, T) @ (T, T) matmul (bf16 MXU operands, f32 accumulation).
    for idx in range(N_POOL):
        v = vs[idx].astype(a_ref.dtype)                             # (Bt, T)
        layer = jnp.dot(v, a_ref[idx],
                        preferred_element_type=jnp.float32) + bias
        o_ref[:, idx:idx + 1, :] = layer.reshape(bt, 1, T)

    # Passthrough of x: channel concat done in-kernel, no XLA concatenate.
    o_ref[:, N_POOL:, :] = x3


def spp_block(x, conv_w, conv_b, interp_mats, *, bt=None):
    """SPPblock.forward: x (B, C, T) -> (B, 4 + C, T)."""
    B, C, T = x.shape
    assert T >= MAX_K, "sequence length must cover the largest pool window"
    # Safety of the circular roll: every lane s*k selected by A_k has its
    # whole max window inside [0, T) because s < T // k.
    for k in POOL_KS:
        assert (T // k) * k <= T

    if bt is None:
        # Largest batch tile <= 8 that divides B.  Tune per generation:
        # as large as VMEM allows on v5e/v6e (1 TC), ~B/2 on v7x (2 TCs).
        bt = max(d for d in range(1, min(B, 8) + 1) if B % d == 0)
    assert B % bt == 0
    n_steps = B // bt

    w = conv_w.reshape(1, C).astype(jnp.float32)
    # Block-diagonal conv weight: one MXU matmul covers all bt batch elements.
    w2 = jnp.kron(jnp.eye(bt, dtype=jnp.float32), w)        # (bt, bt*C)
    b_smem = conv_b.reshape(1).astype(jnp.float32)

    return pl.pallas_call(
        _spp_kernel,
        out_shape=jax.ShapeDtypeStruct((B, N_POOL + C, T), jnp.float32),
        grid=(n_steps,),
        in_specs=[
            pl.BlockSpec((bt, C, T), lambda i: (i, 0, 0)),
            pl.BlockSpec((bt, bt * C), lambda i: (0, 0)),
            pl.BlockSpec(memory_space=pltpu.MemorySpace.SMEM),
            pl.BlockSpec((N_POOL, T, T), lambda i: (0, 0, 0)),
        ],
        out_specs=pl.BlockSpec((bt, N_POOL + C, T), lambda i: (i, 0, 0)),
        compiler_params=pltpu.CompilerParams(
            dimension_semantics=("parallel",)),   # batch tiles over v7x TCs
    )(x.astype(jnp.float32), w2, b_smem, interp_mats)


# ----------------------------------------------------------------------------
# Pure-JAX reference of the PyTorch module (for correctness checking)
# ----------------------------------------------------------------------------

def spp_reference(x, conv_w, conv_b):
    B, C, T = x.shape
    w = conv_w.reshape(1, C)
    outs = []
    for k in POOL_KS:
        To = T // k
        pooled = jnp.max(x[:, :, :To * k].reshape(B, C, To, k), axis=-1)
        conv = jnp.einsum('oc,bcs->bos', w, pooled) + conv_b.reshape(1, 1, 1)
        U = jnp.asarray(_interp_matrix(To, T))
        outs.append(jnp.einsum('bos,st->bot', conv, U))
    outs.append(x)
    return jnp.concatenate(outs, axis=1)


# ----------------------------------------------------------------------------
# Main
# ----------------------------------------------------------------------------

if __name__ == "__main__":
    B, C, T = 2, 16, 128          # small shapes; T >= 6 so all pools are valid

    key = jax.random.PRNGKey(0)
    kx, kw, kb = jax.random.split(key, 3)
    x = jax.random.normal(kx, (B, C, T), dtype=jnp.float32)
    bound = 1.0 / math.sqrt(C)    # nn.Conv1d(C, 1, 1) default init range
    conv_w = jax.random.uniform(kw, (1, C), jnp.float32, -bound, bound)
    conv_b = jax.random.uniform(kb, (1,), jnp.float32, -bound, bound)

    interp_mats = _select_interp_matrices(T)        # (4, T, T) bf16

    spp_jit = jax.jit(spp_block)
    out = spp_jit(x, conv_w, conv_b, interp_mats)
    jax.block_until_ready(out)

    assert out.shape == (B, C + N_POOL, T), out.shape
    assert bool(jnp.all(jnp.isfinite(out)))

    ref = spp_reference(x, conv_w, conv_b)
    max_err = float(jnp.max(jnp.abs(out - ref)))
    # interp matrices are bf16 (perf review) -> allow a few e-2 absolute slack
    assert max_err < 5e-2, f"mismatch vs reference: {max_err}"

    print("KERNEL_OK")
</pallas_src>

<mosaic_0001>
module attributes {stable_mosaic.version = 11 : i64} {
  func.func @_spp_kernel(%arg0: i32, %arg1: memref<2x16x128xf32, #tpu.memory_space<vmem>>, %arg2: memref<2x32xf32, #tpu.memory_space<vmem>>, %arg3: memref<1xf32, #tpu.memory_space<smem>>, %arg4: memref<4x128x128xbf16, #tpu.memory_space<vmem>>, %arg5: memref<2x20x128xf32, #tpu.memory_space<vmem>>) attributes {dimension_semantics = [#tpu.dimension_semantics<parallel>], iteration_bounds = array<i64: 1>, scalar_prefetch = 0 : i64, scratch_operands = 0 : i64, tpu.core_type = #tpu.core_type<tc>, window_params = [{transform_indices = @transform_0, window_bounds = array<i64: 2, 16, 128>}, {pipeline_mode = #tpu.pipeline_mode<synchronous>, transform_indices = @transform_1, window_bounds = array<i64: 2, 32>}, {transform_indices = @transform_2, window_bounds = array<i64: 1>}, {pipeline_mode = #tpu.pipeline_mode<synchronous>, transform_indices = @transform_3, window_bounds = array<i64: 4, 128, 128>}, {transform_indices = @transform_4, window_bounds = array<i64: 2, 20, 128>}]} {
    %c0 = arith.constant 0 : index
    %c0_0 = arith.constant 0 : index
    %c0_1 = arith.constant 0 : index
    %0 = vector.load %arg1[%c0, %c0_0, %c0_1] : memref<2x16x128xf32, #tpu.memory_space<vmem>>, vector<2x16x128xf32>
    %1 = vector.shape_cast %0 : vector<2x16x128xf32> to vector<32x128xf32>
    %c0_2 = arith.constant 0 : index
    %c0_3 = arith.constant 0 : index
    %2 = vector.load %arg2[%c0_2, %c0_3] : memref<2x32xf32, #tpu.memory_space<vmem>>, vector<2x32xf32>
    %c0_4 = arith.constant 0 : index
    %3 = memref.load %arg3[%c0_4] : memref<1xf32, #tpu.memory_space<smem>>
    %c127_i32 = arith.constant 127 : i32
    %4 = tpu.dynamic_rotate %1 by %c127_i32 dim 1 : vector<32x128xf32>, i32 -> vector<32x128xf32>
    %5 = arith.maximumf %1, %4 : vector<32x128xf32>
    %c126_i32 = arith.constant 126 : i32
    %6 = tpu.dynamic_rotate %1 by %c126_i32 dim 1 : vector<32x128xf32>, i32 -> vector<32x128xf32>
    %7 = arith.maximumf %5, %6 : vector<32x128xf32>
    %c125_i32 = arith.constant 125 : i32
    %8 = tpu.dynamic_rotate %1 by %c125_i32 dim 1 : vector<32x128xf32>, i32 -> vector<32x128xf32>
    %9 = arith.maximumf %7, %8 : vector<32x128xf32>
    %c124_i32 = arith.constant 124 : i32
    %10 = tpu.dynamic_rotate %1 by %c124_i32 dim 1 : vector<32x128xf32>, i32 -> vector<32x128xf32>
    %11 = arith.maximumf %9, %10 : vector<32x128xf32>
    %c123_i32 = arith.constant 123 : i32
    %12 = tpu.dynamic_rotate %1 by %c123_i32 dim 1 : vector<32x128xf32>, i32 -> vector<32x128xf32>
    %13 = arith.maximumf %11, %12 : vector<32x128xf32>
    %14 = tpu.concatenate %5, %7, %11, %13 in 1 : vector<32x128xf32>, vector<32x128xf32>, vector<32x128xf32>, vector<32x128xf32> -> vector<32x512xf32>
    %cst = arith.constant dense<0.000000e+00> : vector<2x512xf32>
    %15 = tpu.matmul %2, %14, %cst {dimension_numbers = #tpu.dot_dimension_numbers<[1], [0], [0], [1], [0, 0, 1, 1], [], []>} : vector<2x32xf32>, vector<32x512xf32>, vector<2x512xf32> -> vector<2x512xf32>
    %16 = vector.extract_strided_slice %15 {offsets = [0, 0], sizes = [2, 128], strides = [1, 1]} : vector<2x512xf32> to vector<2x128xf32>
    %17 = vector.extract_strided_slice %15 {offsets = [0, 128], sizes = [2, 128], strides = [1, 1]} : vector<2x512xf32> to vector<2x128xf32>
    %18 = vector.extract_strided_slice %15 {offsets = [0, 256], sizes = [2, 128], strides = [1, 1]} : vector<2x512xf32> to vector<2x128xf32>
    %19 = vector.extract_strided_slice %15 {offsets = [0, 384], sizes = [2, 128], strides = [1, 1]} : vector<2x512xf32> to vector<2x128xf32>
    %20 = arith.truncf %16 : vector<2x128xf32> to vector<2x128xbf16>
    %c0_5 = arith.constant 0 : index
    %c0_6 = arith.constant 0 : index
    %c0_7 = arith.constant 0 : index
    %21 = vector.load %arg4[%c0_5, %c0_6, %c0_7] : memref<4x128x128xbf16, #tpu.memory_space<vmem>>, vector<1x128x128xbf16>
    %22 = vector.shape_cast %21 : vector<1x128x128xbf16> to vector<128x128xbf16>
    %cst_8 = arith.constant dense<0.000000e+00> : vector<2x128xf32>
    %23 = tpu.matmul %20, %22, %cst_8 {dimension_numbers = #tpu.dot_dimension_numbers<[1], [0], [0], [1], [0, 0, 1, 1], [], []>} : vector<2x128xbf16>, vector<128x128xbf16>, vector<2x128xf32> -> vector<2x128xf32>
    %24 = vector.broadcast %3 : f32 to vector<2x128xf32>
    %25 = arith.addf %23, %24 : vector<2x128xf32>
    %26 = vector.shape_cast %25 : vector<2x128xf32> to vector<2x1x128xf32>
    %c0_9 = arith.constant 0 : index
    %c0_10 = arith.constant 0 : index
    %c0_11 = arith.constant 0 : index
    %27 = vector.load %arg5[%c0_9, %c0_10, %c0_11] : memref<2x20x128xf32, #tpu.memory_space<vmem>>, vector<2x1x128xf32>
    tpu.vector_store %arg5[%c0_9, %c0_10, %c0_11], %26 {strides = array<i32>} : memref<2x20x128xf32, #tpu.memory_space<vmem>>, vector<2x1x128xf32>,
    %28 = arith.truncf %17 : vector<2x128xf32> to vector<2x128xbf16>
    %c1 = arith.constant 1 : index
    %c0_12 = arith.constant 0 : index
    %c0_13 = arith.constant 0 : index
    %29 = vector.load %arg4[%c1, %c0_12, %c0_13] : memref<4x128x128xbf16, #tpu.memory_space<vmem>>, vector<1x128x128xbf16>
    %30 = vector.shape_cast %29 : vector<1x128x128xbf16> to vector<128x128xbf16>
    %cst_14 = arith.constant dense<0.000000e+00> : vector<2x128xf32>
    %31 = tpu.matmul %28, %30, %cst_14 {dimension_numbers = #tpu.dot_dimension_numbers<[1], [0], [0], [1], [0, 0, 1, 1], [], []>} : vector<2x128xbf16>, vector<128x128xbf16>, vector<2x128xf32> -> vector<2x128xf32>
    %32 = vector.broadcast %3 : f32 to vector<2x128xf32>
    %33 = arith.addf %31, %32 : vector<2x128xf32>
    %34 = vector.shape_cast %33 : vector<2x128xf32> to vector<2x1x128xf32>
    %c0_15 = arith.constant 0 : index
    %c1_16 = arith.constant 1 : index
    %c0_17 = arith.constant 0 : index
    %35 = vector.load %arg5[%c0_15, %c1_16, %c0_17] : memref<2x20x128xf32, #tpu.memory_space<vmem>>, vector<2x1x128xf32>
    tpu.vector_store %arg5[%c0_15, %c1_16, %c0_17], %34 {strides = array<i32>} : memref<2x20x128xf32, #tpu.memory_space<vmem>>, vector<2x1x128xf32>,
    %36 = arith.truncf %18 : vector<2x128xf32> to vector<2x128xbf16>
    %c2 = arith.constant 2 : index
    %c0_18 = arith.constant 0 : index
    %c0_19 = arith.constant 0 : index
    %37 = vector.load %arg4[%c2, %c0_18, %c0_19] : memref<4x128x128xbf16, #tpu.memory_space<vmem>>, vector<1x128x128xbf16>
    %38 = vector.shape_cast %37 : vector<1x128x128xbf16> to vector<128x128xbf16>
    %cst_20 = arith.constant dense<0.000000e+00> : vector<2x128xf32>
    %39 = tpu.matmul %36, %38, %cst_20 {dimension_numbers = #tpu.dot_dimension_numbers<[1], [0], [0], [1], [0, 0, 1, 1], [], []>} : vector<2x128xbf16>, vector<128x128xbf16>, vector<2x128xf32> -> vector<2x128xf32>
    %40 = vector.broadcast %3 : f32 to vector<2x128xf32>
    %41 = arith.addf %39, %40 : vector<2x128xf32>
    %42 = vector.shape_cast %41 : vector<2x128xf32> to vector<2x1x128xf32>
    %c0_21 = arith.constant 0 : index
    %c2_22 = arith.constant 2 : index
    %c0_23 = arith.constant 0 : index
    %43 = vector.load %arg5[%c0_21, %c2_22, %c0_23] : memref<2x20x128xf32, #tpu.memory_space<vmem>>, vector<2x1x128xf32>
    tpu.vector_store %arg5[%c0_21, %c2_22, %c0_23], %42 {strides = array<i32>} : memref<2x20x128xf32, #tpu.memory_space<vmem>>, vector<2x1x128xf32>,
    %44 = arith.truncf %19 : vector<2x128xf32> to vector<2x128xbf16>
    %c3 = arith.constant 3 : index
    %c0_24 = arith.constant 0 : index
    %c0_25 = arith.constant 0 : index
    %45 = vector.load %arg4[%c3, %c0_24, %c0_25] : memref<4x128x128xbf16, #tpu.memory_space<vmem>>, vector<1x128x128xbf16>
    %46 = vector.shape_cast %45 : vector<1x128x128xbf16> to vector<128x128xbf16>
    %cst_26 = arith.constant dense<0.000000e+00> : vector<2x128xf32>
    %47 = tpu.matmul %44, %46, %cst_26 {dimension_numbers = #tpu.dot_dimension_numbers<[1], [0], [0], [1], [0, 0, 1, 1], [], []>} : vector<2x128xbf16>, vector<128x128xbf16>, vector<2x128xf32> -> vector<2x128xf32>
    %48 = vector.broadcast %3 : f32 to vector<2x128xf32>
    %49 = arith.addf %47, %48 : vector<2x128xf32>
    %50 = vector.shape_cast %49 : vector<2x128xf32> to vector<2x1x128xf32>
    %c0_27 = arith.constant 0 : index
    %c3_28 = arith.constant 3 : index
    %c0_29 = arith.constant 0 : index
    %51 = vector.load %arg5[%c0_27, %c3_28, %c0_29] : memref<2x20x128xf32, #tpu.memory_space<vmem>>, vector<2x1x128xf32>
    tpu.vector_store %arg5[%c0_27, %c3_28, %c0_29], %50 {strides = array<i32>} : memref<2x20x128xf32, #tpu.memory_space<vmem>>, vector<2x1x128xf32>,
    %c0_30 = arith.constant 0 : index
    %c4 = arith.constant 4 : index
    %c0_31 = arith.constant 0 : index
    %52 = vector.load %arg5[%c0_30, %c4, %c0_31] : memref<2x20x128xf32, #tpu.memory_space<vmem>>, vector<2x16x128xf32>
    tpu.vector_store %arg5[%c0_30, %c4, %c0_31], %0 {strides = array<i32>} : memref<2x20x128xf32, #tpu.memory_space<vmem>>, vector<2x16x128xf32>,
    return
  }
  func.func @transform_0(%arg0: i32) -> (i32, i32, i32) {
    %c0_i32 = arith.constant 0 : i32
    %c0_i32_0 = arith.constant 0 : i32
    %c0_i32_1 = arith.constant 0 : i32
    return %arg0, %c0_i32, %c0_i32_0 : i32, i32, i32
  }
  func.func @transform_1(%arg0: i32) -> (i32, i32) {
    %c0_i32 = arith.constant 0 : i32
    %c0_i32_0 = arith.constant 0 : i32
    %c0_i32_1 = arith.constant 0 : i32
    return %c0_i32, %c0_i32_0 : i32, i32
  }
  func.func @transform_2(%arg0: i32) -> i32 {
    %c0_i32 = arith.constant 0 : i32
    %c0_i32_0 = arith.constant 0 : i32
    return %c0_i32 : i32
  }
  func.func @transform_3(%arg0: i32) -> (i32, i32, i32) {
    %c0_i32 = arith.constant 0 : i32
    %c0_i32_0 = arith.constant 0 : i32
    %c0_i32_1 = arith.constant 0 : i32
    %c0_i32_2 = arith.constant 0 : i32
    return %c0_i32, %c0_i32_0, %c0_i32_1 : i32, i32, i32
  }
  func.func @transform_4(%arg0: i32) -> (i32, i32, i32) {
    %c0_i32 = arith.constant 0 : i32
    %c0_i32_0 = arith.constant 0 : i32
    %c0_i32_1 = arith.constant 0 : i32
    return %arg0, %c0_i32, %c0_i32_0 : i32, i32, i32
  }
}

</mosaic_0001>

<llo_original>
// kernel: spp_block.1
$region0: #{spp_block.1}
  #allocation0 [shape = 'u32[]', space=smem, size = 0x4, offset = 0x4, fixed_abs, tag = 'smem constant byte address 0x4 - core index']
  #allocation1 [shape = 'u32[72,128]{1,0:T(1,128)}', space=vmem, size = 0x9000, scoped, tag = 'internal scratch']
  #allocation2 [shape = 'f32[1]{0:T(128)S(6)}', space=smem, size = 0x200, scoped, tag = 'scoped memory for spp_block.1']
  %s0 = inlined_call_operand.hbm [shape: f32[2,16,128], index: 0, kind: input, shape index: {}]
  %s1 = inlined_call_operand.vmem [shape: f32[2,32], index: 1, kind: input, shape index: {}]
  %s2 = inlined_call_operand.<no memory space> [shape: f32[1], index: 2, kind: input, shape index: {}]
  %s3 = inlined_call_operand.hbm [shape: bf16[4,128,128], index: 3, kind: input, shape index: {}]
  %s4 = inlined_call_operand.vmem [shape: f32[2,20,128], index: 4, kind: output, shape index: {}]
  %s5 = sld [smem:[#allocation0]]
  $region34: #{spp_block.1} parent=0
    _
  %s7 = ssub.s32 1, %s5
  %s8 = scalar_select 0, %s7, %s5
  %9 = sst [smem:[#allocation2]] %s2
  $region1: #{spp_block.1} parent=0
    #allocation3 [shape = 'u8[16384]{0}', space=vmem, size = 0x4000, scoped, tag = 'input window, operand 0, single buffered']
    #allocation4 [shape = 's32[1]{0}', space=sflag, size = 0x4, scoped, tag = 'scoped memory for spp_block.1']
    #allocation5 [shape = 'u8[131072]{0}', space=vmem, size = 0x20000, scoped, tag = 'input window, operand 3, single buffered']
    #allocation6 [shape = 's32[1]{0}', space=sflag, size = 0x4, scoped, tag = 'scoped memory for spp_block.1']
    %10 = vsyncpa [#allocation4], 0
    %11 = vsyncpa [#allocation6], 0
    // Predicated region
    $region2: #{spp_block.1} parent=1 // pred_check
      _
    $region3: #{spp_block.1} parent=1 // pred_check_branch
      %13 = sbr.rel (0) target = $region5
    $region4: #{spp_block.1} parent=1 // pred_region
      %15 = vsyncadd [#allocation4], 0
      %s16 = sshll.u32 %s0, 4
      %s17 = int_to_ptr.hbm [resolvable:$true] %s16
      %s18 = sshll.u32 [#allocation3], 4
      %s19 = int_to_ptr.vmem [resolvable:$true] %s18
      %24 = dma.hbm_to_vmem [thread:$0]  %s17, 512, %s19, [#allocation4], 128, 128, 8
    $region5: #{spp_block.1} parent=1 // pred_fallthru
      _
    // Predicated region
    $region6: #{spp_block.1} parent=1 // pred_check
      _
    $region7: #{spp_block.1} parent=1 // pred_check_branch
      %26 = sbr.rel (0) target = $region9
    $region8: #{spp_block.1} parent=1 // pred_region
      _
    $region9: #{spp_block.1} parent=1 // pred_fallthru
      _
    // Predicated region
    $region10: #{spp_block.1} parent=1 // pred_check
      _
    $region11: #{spp_block.1} parent=1 // pred_check_branch
      %28 = sbr.rel (0) target = $region13
    $region12: #{spp_block.1} parent=1 // pred_region
      _
    $region13: #{spp_block.1} parent=1 // pred_fallthru
      _
    // Predicated region
    $region14: #{spp_block.1} parent=1 // pred_check
      _
    $region15: #{spp_block.1} parent=1 // pred_check_branch
      %30 = sbr.rel (0) target = $region17
    $region16: #{spp_block.1} parent=1 // pred_region
      %32 = vsyncadd [#allocation6], 0
      %s33 = sshll.u32 %s3, 4
      %s34 = int_to_ptr.hbm [resolvable:$true] %s33
      %s35 = sshll.u32 [#allocation5], 4
      %s36 = int_to_ptr.vmem [resolvable:$true] %s35
      %41 = dma.hbm_to_vmem [thread:$0]  %s34, 4096, %s36, [#allocation6], 64, 64, 4
    $region17: #{spp_block.1} parent=1 // pred_fallthru
      _
    // Predicated region
    $region18: #{spp_block.1} parent=1 // pred_check
      _
    $region19: #{spp_block.1} parent=1 // pred_check_branch
      %43 = sbr.rel (0) target = $region21
    $region20: #{spp_block.1} parent=1 // pred_region
      %45 = dma.done [#allocation4], 512
    $region21: #{spp_block.1} parent=1 // pred_fallthru
      _
    // Predicated region
    $region22: #{spp_block.1} parent=1 // pred_check
      _
    $region23: #{spp_block.1} parent=1 // pred_check_branch
      %47 = sbr.rel (0) target = $region25
    $region24: #{spp_block.1} parent=1 // pred_region
      %49 = dma.done [#allocation6], 4096
    $region25: #{spp_block.1} parent=1 // pred_fallthru
      _
    %v50 = vld [vmem:[#allocation3] sm:$0xff]
    %v51 = vld [vmem:[#allocation3 + $0x8] sm:$0xff]
    %v52 = vld [vmem:[#allocation3 + $0x10] sm:$0xff]
    %v53 = vld [vmem:[#allocation3 + $0x18] sm:$0xff]
    %v54 = vld [vmem:[%s1] sm:$0x3]
    %s55 = sld [smem:[#allocation2]]
    %56 = vrot.lane.b32.xlu0 %v50, 127
    %v57 = vpop.permute.xlu0 %56
    %58 = vrot.lane.b32.xlu0 %v51, 127
    %v59 = vpop.permute.xlu0 %58
    %60 = vrot.lane.b32.xlu0 %v52, 127
    %v61 = vpop.permute.xlu0 %60
    %62 = vrot.lane.b32.xlu0 %v53, 127
    %v63 = vpop.permute.xlu0 %62
    %v64 = vmax.f32 %v50, %v57
    %v65 = vmax.f32 %v51, %v59
    %v66 = vmax.f32 %v52, %v61
    %v67 = vmax.f32 %v53, %v63
    %68 = vrot.lane.b32.xlu0 %v50, 126
    %v69 = vpop.permute.xlu0 %68
    %70 = vrot.lane.b32.xlu0 %v51, 126
    %v71 = vpop.permute.xlu0 %70
    %72 = vrot.lane.b32.xlu0 %v52, 126
    %v73 = vpop.permute.xlu0 %72
    %74 = vrot.lane.b32.xlu0 %v53, 126
    %v75 = vpop.permute.xlu0 %74
    %v76 = vmax.f32 %v64, %v69
    %v77 = vmax.f32 %v65, %v71
    %v78 = vmax.f32 %v66, %v73
    %v79 = vmax.f32 %v67, %v75
    %80 = vrot.lane.b32.xlu0 %v50, 125
    %v81 = vpop.permute.xlu0 %80
    %82 = vrot.lane.b32.xlu0 %v51, 125
    %v83 = vpop.permute.xlu0 %82
    %84 = vrot.lane.b32.xlu0 %v52, 125
    %v85 = vpop.permute.xlu0 %84
    %86 = vrot.lane.b32.xlu0 %v53, 125
    %v87 = vpop.permute.xlu0 %86
    %v88 = vmax.f32 %v76, %v81
    %v89 = vmax.f32 %v77, %v83
    %v90 = vmax.f32 %v78, %v85
    %v91 = vmax.f32 %v79, %v87
    %92 = vrot.lane.b32.xlu0 %v50, 124
    %v93 = vpop.permute.xlu0 %92
    %94 = vrot.lane.b32.xlu0 %v51, 124
    %v95 = vpop.permute.xlu0 %94
    %96 = vrot.lane.b32.xlu0 %v52, 124
    %v97 = vpop.permute.xlu0 %96
    %98 = vrot.lane.b32.xlu0 %v53, 124
    %v99 = vpop.permute.xlu0 %98
    %v100 = vmax.f32 %v88, %v93
    %v101 = vmax.f32 %v89, %v95
    %v102 = vmax.f32 %v90, %v97
    %v103 = vmax.f32 %v91, %v99
    %104 = vrot.lane.b32.xlu0 %v50, 123
    %v105 = vpop.permute.xlu0 %104
    %106 = vrot.lane.b32.xlu0 %v51, 123
    %v107 = vpop.permute.xlu0 %106
    %108 = vrot.lane.b32.xlu0 %v52, 123
    %v109 = vpop.permute.xlu0 %108
    %110 = vrot.lane.b32.xlu0 %v53, 123
    %v111 = vpop.permute.xlu0 %110
    %v112 = vmax.f32 %v100, %v105
    %v113 = vmax.f32 %v101, %v107
    %v114 = vmax.f32 %v102, %v109
    %v115 = vmax.f32 %v103, %v111
    %vm116 = vcmask 261120
    %v118 = vsel %vm116, %v54, 0
    %120 = vmatpush.msra.mxu0 0.0
    %121 = vmatpush.msra.mxu0 0.0
    %122 = vmatpush.msra.mxu0 0.0
    %123 = vmatpush.msra.mxu0 0.0
    %124 = vmatpush.msra.mxu0 0.0
    %125 = vmatpush.msra.mxu0 0.0
    %126 = vmatpush.msra.mxu0 0.0
    %127 = vmatpush.msra.mxu0 0.0
    %128 = vmatpush.msra.mxu0 0.0
    %129 = vmatpush.msra.mxu0 0.0
    %130 = vmatpush.msra.mxu0 0.0
    %131 = vmatpush.msra.mxu0 0.0
    %132 = vmatpush.msra.mxu0 %v67
    %133 = vmatpush.msra.mxu0 %v66
    %134 = vmatpush.msra.mxu0 %v65
    %135 = vmatpush.msra.mxu0 %v64
    %136 = vmatmul.f32.gmra.mxu0 %v118
    %v137 = vpop.f32.mrf.mxu0
    %v138 = vadd.f32 0.0, %v137
    %139 = vdwg.mxu0
    %140 = vmatpush.msra.mxu0 0.0
    %141 = vmatpush.msra.mxu0 0.0
    %142 = vmatpush.msra.mxu0 0.0
    %143 = vmatpush.msra.mxu0 0.0
    %144 = vmatpush.msra.mxu0 0.0
    %145 = vmatpush.msra.mxu0 0.0
    %146 = vmatpush.msra.mxu0 0.0
    %147 = vmatpush.msra.mxu0 0.0
    %148 = vmatpush.msra.mxu0 0.0
    %149 = vmatpush.msra.mxu0 0.0
    %150 = vmatpush.msra.mxu0 0.0
    %151 = vmatpush.msra.mxu0 0.0
    %152 = vmatpush.msra.mxu0 %v79
    %153 = vmatpush.msra.mxu0 %v78
    %154 = vmatpush.msra.mxu0 %v77
    %155 = vmatpush.msra.mxu0 %v76
    %156 = vmatmul.f32.gmra.mxu0 %v118
    %v157 = vpop.f32.mrf.mxu0
    %v158 = vadd.f32 0.0, %v157
    %159 = vdwg.mxu0
    %160 = vmatpush.msra.mxu0 0.0
    %161 = vmatpush.msra.mxu0 0.0
    %162 = vmatpush.msra.mxu0 0.0
    %163 = vmatpush.msra.mxu0 0.0
    %164 = vmatpush.msra.mxu0 0.0
    %165 = vmatpush.msra.mxu0 0.0
    %166 = vmatpush.msra.mxu0 0.0
    %167 = vmatpush.msra.mxu0 0.0
    %168 = vmatpush.msra.mxu0 0.0
    %169 = vmatpush.msra.mxu0 0.0
    %170 = vmatpush.msra.mxu0 0.0
    %171 = vmatpush.msra.mxu0 0.0
    %172 = vmatpush.msra.mxu0 %v103
    %173 = vmatpush.msra.mxu0 %v102
    %174 = vmatpush.msra.mxu0 %v101
    %175 = vmatpush.msra.mxu0 %v100
    %176 = vmatmul.f32.gmra.mxu0 %v118
    %v177 = vpop.f32.mrf.mxu0
    %v178 = vadd.f32 0.0, %v177
    %179 = vdwg.mxu0
    %180 = vmatpush.msra.mxu0 0.0
    %181 = vmatpush.msra.mxu0 0.0
    %182 = vmatpush.msra.mxu0 0.0
    %183 = vmatpush.msra.mxu0 0.0
    %184 = vmatpush.msra.mxu0 0.0
    %185 = vmatpush.msra.mxu0 0.0
    %186 = vmatpush.msra.mxu0 0.0
    %187 = vmatpush.msra.mxu0 0.0
    %188 = vmatpush.msra.mxu0 0.0
    %189 = vmatpush.msra.mxu0 0.0
    %190 = vmatpush.msra.mxu0 0.0
    %191 = vmatpush.msra.mxu0 0.0
    %192 = vmatpush.msra.mxu0 %v115
    %193 = vmatpush.msra.mxu0 %v114
    %194 = vmatpush.msra.mxu0 %v113
    %195 = vmatpush.msra.mxu0 %v112
    %196 = vmatmul.f32.gmra.mxu0 %v118
    %v197 = vpop.f32.mrf.mxu0
    %v198 = vadd.f32 0.0, %v197
    %199 = vdwg.mxu0
    %v200 = vpack.c.bf16 %v138, %v138
    %v201 = vld [vmem:[#allocation5] sm:$0xf]
    %v202 = vld [vmem:[#allocation5 + $0x4] sm:$0xf]
    %v203 = vld [vmem:[#allocation5 + $0x8] sm:$0xf]
    %v204 = vld [vmem:[#allocation5 + $0xc] sm:$0xf]
    %v205 = vld [vmem:[#allocation5 + $0x10] sm:$0xf]
    %v206 = vld [vmem:[#allocation5 + $0x14] sm:$0xf]
    %v207 = vld [vmem:[#allocation5 + $0x18] sm:$0xf]
    %v208 = vld [vmem:[#allocation5 + $0x1c] sm:$0xf]
    %v209 = vld [vmem:[#allocation5 + $0x20] sm:$0xf]
    %v210 = vld [vmem:[#allocation5 + $0x24] sm:$0xf]
    %v211 = vld [vmem:[#allocation5 + $0x28] sm:$0xf]
    %v212 = vld [vmem:[#allocation5 + $0x2c] sm:$0xf]
    %v213 = vld [vmem:[#allocation5 + $0x30] sm:$0xf]
    %v214 = vld [vmem:[#allocation5 + $0x34] sm:$0xf]
    %v215 = vld [vmem:[#allocation5 + $0x38] sm:$0xf]
    %v216 = vld [vmem:[#allocation5 + $0x3c] sm:$0xf]
    %v217 = vstv %s55
    %v234 = vunpack.c.l.b16 %v201
    %v235 = vunpack.c.l.b16 %v202
    %v236 = vunpack.c.l.b16 %v203
    %v237 = vunpack.c.l.b16 %v204
    %v238 = vunpack.c.l.b16 %v205
    %v239 = vunpack.c.l.b16 %v206
    %v240 = vunpack.c.l.b16 %v207
    %v241 = vunpack.c.l.b16 %v208
    %v242 = vunpack.c.l.b16 %v209
    %v243 = vunpack.c.l.b16 %v210
    %v244 = vunpack.c.l.b16 %v211
    %v245 = vunpack.c.l.b16 %v212
    %v246 = vunpack.c.l.b16 %v213
    %v247 = vunpack.c.l.b16 %v214
    %v248 = vunpack.c.l.b16 %v215
    %v249 = vunpack.c.l.b16 %v216
    %v250 = vpack.c.b16 %v235, %v234
    %v251 = vpack.c.b16 %v237, %v236
    %v252 = vpack.c.b16 %v239, %v238
    %v253 = vpack.c.b16 %v241, %v240
    %v254 = vpack.c.b16 %v243, %v242
    %v255 = vpack.c.b16 %v245, %v244
    %v256 = vpack.c.b16 %v247, %v246
    %v257 = vpack.c.b16 %v249, %v248
    %266 = vmatpush.bf16.msra.mxu0 %v257
    %267 = vmatpush.bf16.msra.mxu0 %v256
    %268 = vmatpush.bf16.msra.mxu0 %v255
    %269 = vmatpush.bf16.msra.mxu0 %v254
    %270 = vmatpush.bf16.msra.mxu0 %v253
    %271 = vmatpush.bf16.msra.mxu0 %v252
    %272 = vmatpush.bf16.msra.mxu0 %v251
    %273 = vmatpush.bf16.msra.mxu0 %v250
    %274 = vmatmul.bf16.gmra.mxu0 %v200
    %v275 = vpop.f32.mrf.mxu0
    %v276 = vadd.f32 %v217, %v275
    %v277 = vpop.f32.mrf.mxu0
    %278 = vdwg.mxu0
    %v280 = vrot.slane %v276, 1
    %282 = vst [vmem:[%s4] sm:$0x1] %v276
    %283 = vst [vmem:[%s4 + $0x18] sm:$0x1] %v280
    %v284 = vpack.c.bf16 %v158, %v158
    %s285 = scalar_lea.vmem [#allocation5], 64
    %v286 = vld [vmem:[%s285] sm:$0xf]
    %v287 = vld [vmem:[%s285 + $0x4] sm:$0xf]
    %v288 = vld [vmem:[%s285 + $0x8] sm:$0xf]
    %v289 = vld [vmem:[%s285 + $0xc] sm:$0xf]
    %v290 = vld [vmem:[%s285 + $0x10] sm:$0xf]
    %v291 = vld [vmem:[%s285 + $0x14] sm:$0xf]
    %v292 = vld [vmem:[%s285 + $0x18] sm:$0xf]
    %v293 = vld [vmem:[%s285 + $0x1c] sm:$0xf]
    %v294 = vld [vmem:[%s285 + $0x20] sm:$0xf]
    %v295 = vld [vmem:[%s285 + $0x24] sm:$0xf]
    %v296 = vld [vmem:[%s285 + $0x28] sm:$0xf]
    %v297 = vld [vmem:[%s285 + $0x2c] sm:$0xf]
    %v298 = vld [vmem:[%s285 + $0x30] sm:$0xf]
    %v299 = vld [vmem:[%s285 + $0x34] sm:$0xf]
    %v300 = vld [vmem:[%s285 + $0x38] sm:$0xf]
    %v301 = vld [vmem:[%s285 + $0x3c] sm:$0xf]
    %v318 = vunpack.c.l.b16 %v286
    %v319 = vunpack.c.l.b16 %v287
    %v320 = vunpack.c.l.b16 %v288
    %v321 = vunpack.c.l.b16 %v289
    %v322 = vunpack.c.l.b16 %v290
    %v323 = vunpack.c.l.b16 %v291
    %v324 = vunpack.c.l.b16 %v292
    %v325 = vunpack.c.l.b16 %v293
    %v326 = vunpack.c.l.b16 %v294
    %v327 = vunpack.c.l.b16 %v295
    %v328 = vunpack.c.l.b16 %v296
    %v329 = vunpack.c.l.b16 %v297
    %v330 = vunpack.c.l.b16 %v298
    %v331 = vunpack.c.l.b16 %v299
    %v332 = vunpack.c.l.b16 %v300
    %v333 = vunpack.c.l.b16 %v301
    %v334 = vpack.c.b16 %v319, %v318
    %v335 = vpack.c.b16 %v321, %v320
    %v336 = vpack.c.b16 %v323, %v322
    %v337 = vpack.c.b16 %v325, %v324
    %v338 = vpack.c.b16 %v327, %v326
    %v339 = vpack.c.b16 %v329, %v328
    %v340 = vpack.c.b16 %v331, %v330
    %v341 = vpack.c.b16 %v333, %v332
    %350 = vmatpush.bf16.msra.mxu0 %v341
    %351 = vmatpush.bf16.msra.mxu0 %v340
    %352 = vmatpush.bf16.msra.mxu0 %v339
    %353 = vmatpush.bf16.msra.mxu0 %v338
    %354 = vmatpush.bf16.msra.mxu0 %v337
    %355 = vmatpush.bf16.msra.mxu0 %v336
    %356 = vmatpush.bf16.msra.mxu0 %v335
    %357 = vmatpush.bf16.msra.mxu0 %v334
    %358 = vmatmul.bf16.gmra.mxu0 %v284
    %v359 = vpop.f32.mrf.mxu0
    %v360 = vadd.f32 %v217, %v359
    %v361 = vpop.f32.mrf.mxu0
    %362 = vdwg.mxu0
    %v364 = vrot.slane %v360, 1
    %366 = vst [vmem:[%s4 + $0x1] sm:$0x1] %v360
    %367 = vst [vmem:[%s4 + $0x19] sm:$0x1] %v364
    %v368 = vpack.c.bf16 %v178, %v178
    %s369 = scalar_lea.vmem [#allocation5], 128
    %v370 = vld [vmem:[%s369] sm:$0xf]
    %v371 = vld [vmem:[%s369 + $0x4] sm:$0xf]
    %v372 = vld [vmem:[%s369 + $0x8] sm:$0xf]
    %v373 = vld [vmem:[%s369 + $0xc] sm:$0xf]
    %v374 = vld [vmem:[%s369 + $0x10] sm:$0xf]
    %v375 = vld [vmem:[%s369 + $0x14] sm:$0xf]
    %v376 = vld [vmem:[%s369 + $0x18] sm:$0xf]
    %v377 = vld [vmem:[%s369 + $0x1c] sm:$0xf]
    %v378 = vld [vmem:[%s369 + $0x20] sm:$0xf]
    %v379 = vld [vmem:[%s369 + $0x24] sm:$0xf]
    %v380 = vld [vmem:[%s369 + $0x28] sm:$0xf]
    %v381 = vld [vmem:[%s369 + $0x2c] sm:$0xf]
    %v382 = vld [vmem:[%s369 + $0x30] sm:$0xf]
    %v383 = vld [vmem:[%s369 + $0x34] sm:$0xf]
    %v384 = vld [vmem:[%s369 + $0x38] sm:$0xf]
    %v385 = vld [vmem:[%s369 + $0x3c] sm:$0xf]
    %v402 = vunpack.c.l.b16 %v370
    %v403 = vunpack.c.l.b16 %v371
    %v404 = vunpack.c.l.b16 %v372
    %v405 = vunpack.c.l.b16 %v373
    %v406 = vunpack.c.l.b16 %v374
    %v407 = vunpack.c.l.b16 %v375
    %v408 = vunpack.c.l.b16 %v376
    %v409 = vunpack.c.l.b16 %v377
    %v410 = vunpack.c.l.b16 %v378
    %v411 = vunpack.c.l.b16 %v379
    %v412 = vunpack.c.l.b16 %v380
    %v413 = vunpack.c.l.b16 %v381
    %v414 = vunpack.c.l.b16 %v382
    %v415 = vunpack.c.l.b16 %v383
    %v416 = vunpack.c.l.b16 %v384
    %v417 = vunpack.c.l.b16 %v385
    %v418 = vpack.c.b16 %v403, %v402
    %v419 = vpack.c.b16 %v405, %v404
    %v420 = vpack.c.b16 %v407, %v406
    %v421 = vpack.c.b16 %v409, %v408
    %v422 = vpack.c.b16 %v411, %v410
    %v423 = vpack.c.b16 %v413, %v412
    %v424 = vpack.c.b16 %v415, %v414
    %v425 = vpack.c.b16 %v417, %v416
    %434 = vmatpush.bf16.msra.mxu0 %v425
    %435 = vmatpush.bf16.msra.mxu0 %v424
    %436 = vmatpush.bf16.msra.mxu0 %v423
    %437 = vmatpush.bf16.msra.mxu0 %v422
    %438 = vmatpush.bf16.msra.mxu0 %v421
    %439 = vmatpush.bf16.msra.mxu0 %v420
    %440 = vmatpush.bf16.msra.mxu0 %v419
    %441 = vmatpush.bf16.msra.mxu0 %v418
    %442 = vmatmul.bf16.gmra.mxu0 %v368
    %v443 = vpop.f32.mrf.mxu0
    %v444 = vadd.f32 %v217, %v443
    %v445 = vpop.f32.mrf.mxu0
    %446 = vdwg.mxu0
    %v448 = vrot.slane %v444, 1
    %450 = vst [vmem:[%s4 + $0x2] sm:$0x1] %v444
    %451 = vst [vmem:[%s4 + $0x1a] sm:$0x1] %v448
    %v452 = vpack.c.bf16 %v198, %v198
    %s453 = scalar_lea.vmem [#allocation5], 192
    %v454 = vld [vmem:[%s453] sm:$0xf]
    %v455 = vld [vmem:[%s453 + $0x4] sm:$0xf]
    %v456 = vld [vmem:[%s453 + $0x8] sm:$0xf]
    %v457 = vld [vmem:[%s453 + $0xc] sm:$0xf]
    %v458 = vld [vmem:[%s453 + $0x10] sm:$0xf]
    %v459 = vld [vmem:[%s453 + $0x14] sm:$0xf]
    %v460 = vld [vmem:[%s453 + $0x18] sm:$0xf]
    %v461 = vld [vmem:[%s453 + $0x1c] sm:$0xf]
    %v462 = vld [vmem:[%s453 + $0x20] sm:$0xf]
    %v463 = vld [vmem:[%s453 + $0x24] sm:$0xf]
    %v464 = vld [vmem:[%s453 + $0x28] sm:$0xf]
    %v465 = vld [vmem:[%s453 + $0x2c] sm:$0xf]
    %v466 = vld [vmem:[%s453 + $0x30] sm:$0xf]
    %v467 = vld [vmem:[%s453 + $0x34] sm:$0xf]
    %v468 = vld [vmem:[%s453 + $0x38] sm:$0xf]
    %v469 = vld [vmem:[%s453 + $0x3c] sm:$0xf]
    %v486 = vunpack.c.l.b16 %v454
    %v487 = vunpack.c.l.b16 %v455
    %v488 = vunpack.c.l.b16 %v456
    %v489 = vunpack.c.l.b16 %v457
    %v490 = vunpack.c.l.b16 %v458
    %v491 = vunpack.c.l.b16 %v459
    %v492 = vunpack.c.l.b16 %v460
    %v493 = vunpack.c.l.b16 %v461
    %v494 = vunpack.c.l.b16 %v462
    %v495 = vunpack.c.l.b16 %v463
    %v496 = vunpack.c.l.b16 %v464
    %v497 = vunpack.c.l.b16 %v465
    %v498 = vunpack.c.l.b16 %v466
    %v499 = vunpack.c.l.b16 %v467
    %v500 = vunpack.c.l.b16 %v468
    %v501 = vunpack.c.l.b16 %v469
    %v502 = vpack.c.b16 %v487, %v486
    %v503 = vpack.c.b16 %v489, %v488
    %v504 = vpack.c.b16 %v491, %v490
    %v505 = vpack.c.b16 %v493, %v492
    %v506 = vpack.c.b16 %v495, %v494
    %v507 = vpack.c.b16 %v497, %v496
    %v508 = vpack.c.b16 %v499, %v498
    %v509 = vpack.c.b16 %v501, %v500
    %518 = vmatpush.bf16.msra.mxu0 %v509
    %519 = vmatpush.bf16.msra.mxu0 %v508
    %520 = vmatpush.bf16.msra.mxu0 %v507
    %521 = vmatpush.bf16.msra.mxu0 %v506
    %522 = vmatpush.bf16.msra.mxu0 %v505
    %523 = vmatpush.bf16.msra.mxu0 %v504
    %524 = vmatpush.bf16.msra.mxu0 %v503
    %525 = vmatpush.bf16.msra.mxu0 %v502
    %526 = vmatmul.bf16.gmra.mxu0 %v452
    %v527 = vpop.f32.mrf.mxu0
    %v528 = vadd.f32 %v217, %v527
    %v529 = vpop.f32.mrf.mxu0
    %530 = vdwg.mxu0
    %v532 = vrot.slane %v528, 1
    %534 = vst [vmem:[%s4 + $0x3] sm:$0x1] %v528
    %535 = vst [vmem:[%s4 + $0x1b] sm:$0x1] %v532
    %536 = vst [vmem:[%s4 + $0x4] sm:$0xff] %v50
    %537 = vst [vmem:[%s4 + $0xc] sm:$0xff] %v51
    %538 = vst [vmem:[%s4 + $0x1c] sm:$0xff] %v52
    %539 = vst [vmem:[%s4 + $0x24] sm:$0xff] %v53
    // Predicated region
    $region26: #{spp_block.1} parent=1 // pred_check
      _
    $region27: #{spp_block.1} parent=1 // pred_check_branch
      %541 = sbr.rel (0) target = $region29
    $region28: #{spp_block.1} parent=1 // pred_region
      _
    $region29: #{spp_block.1} parent=1 // pred_fallthru
      _
    // Predicated region
    $region30: #{spp_block.1} parent=1 // pred_check
      _
    $region31: #{spp_block.1} parent=1 // pred_check_branch
      %543 = sbr.rel (0) target = $region33
    $region32: #{spp_block.1} parent=1 // pred_region
      _
    $region33: #{spp_block.1} parent=1 // pred_fallthru
      _
    %544 = vsyncpa [#allocation4], 1
    %545 = vsyncpa [#allocation6], 1

</llo_original>
